<compile_context>
chip_gen: v6e
topology: v6e:2x2x1
jax: 0.10.0
libtpu: 0.0.40
codegen_flags: <defaults>
</compile_context>

<pallas_src>
import functools

import jax
import jax.numpy as jnp
from jax.experimental import pallas as pl
from jax.experimental.pallas import tpu as pltpu


def _round_up(n, m):
    return ((n + m - 1) // m) * m


def _stats_pool_kernel(x_ref, mean_ref, std_ref, sum_ref, sumsq_ref, *, t_true):
    """Single-pass sum / sum-of-squares reduction over the tiled time axis.

    x_ref:               (row_tile, t_tile) input tile (native dtype)
    mean_ref, std_ref:   (row_tile, 1) outputs (resident across T tiles)
    sum_ref, sumsq_ref:  (row_tile, 1) f32 VMEM accumulators
    """
    k = pl.program_id(1)

    @pl.when(k == 0)
    def _():
        sum_ref[...] = jnp.zeros_like(sum_ref)
        sumsq_ref[...] = jnp.zeros_like(sumsq_ref)

    x = x_ref[...].astype(jnp.float32)
    sum_ref[...] += jnp.sum(x, axis=-1, keepdims=True)
    sumsq_ref[...] += jnp.sum(x * x, axis=-1, keepdims=True)

    @pl.when(k == pl.num_programs(1) - 1)
    def _():
        inv_t = jnp.float32(1.0 / t_true)          # compile-time constant
        mean = sum_ref[...] * inv_t
        # Clamp at 0: cancellation can make E[x^2] - mean^2 slightly negative.
        var = jnp.maximum(sumsq_ref[...] * inv_t - mean * mean, 0.0)
        std = jnp.sqrt(var + 1e-5)
        mean_ref[...] = mean.astype(mean_ref.dtype)
        std_ref[...] = std.astype(std_ref.dtype)


def stats_pooling(x, *, row_tile=256, t_tile=1024):
    """x: (B, C, T) -> (B, 2*C), matching StatsPooling.forward."""
    B, C, T = x.shape
    R = B * C
    x2 = x.reshape(R, T)  # free in row-major: rows = (batch, channel)

    # Tile sizes: multiples of (8 sublanes, 128 lanes); shrink for small shapes.
    rt = min(row_tile, _round_up(R, 8))
    tt = min(t_tile, _round_up(T, 128))

    R_pad = _round_up(R, rt)
    T_pad = _round_up(T, tt)
    if R_pad != R or T_pad != T:
        # Zero padding is harmless: zeros add nothing to sum / sum-of-squares and
        # we always divide by the true T; padded rows are sliced off below.
        x2 = jnp.pad(x2, ((0, R_pad - R), (0, T_pad - T)))

    grid = (R_pad // rt, T_pad // tt)
    kernel = functools.partial(_stats_pool_kernel, t_true=T)

    mean_out, std_out = pl.pallas_call(
        kernel,
        out_shape=(
            jax.ShapeDtypeStruct((R_pad, 1), x.dtype),
            jax.ShapeDtypeStruct((R_pad, 1), x.dtype),
        ),
        grid_spec=pltpu.PrefetchScalarGridSpec(
            num_scalar_prefetch=0,
            grid=grid,
            in_specs=[pl.BlockSpec((rt, tt), lambda r, k: (r, k))],
            out_specs=[
                pl.BlockSpec((rt, 1), lambda r, k: (r, 0)),
                pl.BlockSpec((rt, 1), lambda r, k: (r, 0)),
            ],
            scratch_shapes=[
                pltpu.VMEM((rt, 1), jnp.float32),
                pltpu.VMEM((rt, 1), jnp.float32),
            ],
        ),
        compiler_params=pltpu.CompilerParams(
            dimension_semantics=("parallel", "arbitrary"),
            vmem_limit_bytes=32 * 1024 * 1024,
        ),
    )(x2)

    mean = mean_out[:R, 0].reshape(B, C)
    std = std_out[:R, 0].reshape(B, C)
    return jnp.concatenate([mean, std], axis=-1)


def _reference(x):
    mean = jnp.mean(x, axis=-1, keepdims=True)
    std = jnp.sqrt(jnp.mean((x - mean) ** 2, axis=-1) + 1e-5)
    return jnp.concatenate([jnp.squeeze(mean, -1), std], axis=-1)


if __name__ == "__main__":
    key = jax.random.PRNGKey(0)
    k1, k2 = jax.random.split(key)

    # Small shape consistent with the module: batch=2, channels=8, time=128.
    x = jax.random.normal(k1, (2, 8, 128), dtype=jnp.float32)
    out = jax.block_until_ready(stats_pooling(x))
    ref = _reference(x)
    assert out.shape == (2, 16), out.shape
    assert jnp.allclose(out, ref, atol=5e-5, rtol=5e-5), "mismatch vs reference"

    # Unaligned shape exercises the zero-padding path (rows not /8, time not /128).
    x2 = jax.random.normal(k2, (3, 5, 100), dtype=jnp.float32) * 2.0 + 0.5
    out2 = jax.block_until_ready(stats_pooling(x2))
    ref2 = _reference(x2)
    assert out2.shape == (3, 10), out2.shape
    assert jnp.allclose(out2, ref2, atol=5e-5, rtol=5e-5), "mismatch vs reference (padded)"

    print("KERNEL_OK")
</pallas_src>

<mosaic_0001>
module attributes {stable_mosaic.version = 11 : i64} {
  func.func @_stats_pool_kernel(%arg0: i32, %arg1: i32, %arg2: memref<16x128xf32, #tpu.memory_space<vmem>>, %arg3: memref<16x1xf32, #tpu.memory_space<vmem>>, %arg4: memref<16x1xf32, #tpu.memory_space<vmem>>, %arg5: memref<16x1xf32, #tpu.memory_space<vmem>>, %arg6: memref<16x1xf32, #tpu.memory_space<vmem>>) attributes {dimension_semantics = [#tpu.dimension_semantics<parallel>, #tpu.dimension_semantics<arbitrary>], iteration_bounds = array<i64: 1, 1>, scalar_prefetch = 0 : i64, scratch_operands = 2 : i64, tpu.core_type = #tpu.core_type<tc>, window_params = [{transform_indices = @transform_0, window_bounds = array<i64: 16, 128>}, {transform_indices = @transform_1, window_bounds = array<i64: 16, 1>}, {transform_indices = @transform_2, window_bounds = array<i64: 16, 1>}]} {
    %c0_i32 = arith.constant 0 : i32
    %0 = arith.cmpi eq, %arg1, %c0_i32 : i32
    %1 = arith.extui %0 : i1 to i32
    %c0_i32_0 = arith.constant 0 : i32
    %2 = arith.cmpi ne, %1, %c0_i32_0 : i32
    scf.if %2 {
      %cst_13 = arith.constant 0.000000e+00 : f32
      %18 = vector.broadcast %cst_13 : f32 to vector<16x1xf32>
      %c0_14 = arith.constant 0 : index
      %c0_15 = arith.constant 0 : index
      %19 = vector.load %arg5[%c0_14, %c0_15] : memref<16x1xf32, #tpu.memory_space<vmem>>, vector<16x1xf32>
      tpu.vector_store %arg5[%c0_14, %c0_15], %18 {strides = array<i32>} : memref<16x1xf32, #tpu.memory_space<vmem>>, vector<16x1xf32>,
      %cst_16 = arith.constant 0.000000e+00 : f32
      %20 = vector.broadcast %cst_16 : f32 to vector<16x1xf32>
      %c0_17 = arith.constant 0 : index
      %c0_18 = arith.constant 0 : index
      %21 = vector.load %arg6[%c0_17, %c0_18] : memref<16x1xf32, #tpu.memory_space<vmem>>, vector<16x1xf32>
      tpu.vector_store %arg6[%c0_17, %c0_18], %20 {strides = array<i32>} : memref<16x1xf32, #tpu.memory_space<vmem>>, vector<16x1xf32>,
    } else {
    }
    %c0 = arith.constant 0 : index
    %c0_1 = arith.constant 0 : index
    %3 = vector.load %arg2[%c0, %c0_1] : memref<16x128xf32, #tpu.memory_space<vmem>>, vector<16x128xf32>
    %c0_2 = arith.constant 0 : index
    %c0_3 = arith.constant 0 : index
    %4 = vector.load %arg5[%c0_2, %c0_3] : memref<16x1xf32, #tpu.memory_space<vmem>>, vector<16x1xf32>
    %cst = arith.constant dense<0.000000e+00> : vector<16xf32>
    %5 = vector.multi_reduction <add>, %3, %cst [1] : vector<16x128xf32> to vector<16xf32>
    %6 = vector.shape_cast %5 : vector<16xf32> to vector<16x1xf32>
    %7 = arith.addf %4, %6 : vector<16x1xf32>
    %c0_4 = arith.constant 0 : index
    %c0_5 = arith.constant 0 : index
    %8 = vector.load %arg5[%c0_4, %c0_5] : memref<16x1xf32, #tpu.memory_space<vmem>>, vector<16x1xf32>
    tpu.vector_store %arg5[%c0_4, %c0_5], %7 {strides = array<i32>} : memref<16x1xf32, #tpu.memory_space<vmem>>, vector<16x1xf32>,
    %c0_6 = arith.constant 0 : index
    %c0_7 = arith.constant 0 : index
    %9 = vector.load %arg6[%c0_6, %c0_7] : memref<16x1xf32, #tpu.memory_space<vmem>>, vector<16x1xf32>
    %10 = arith.mulf %3, %3 : vector<16x128xf32>
    %cst_8 = arith.constant dense<0.000000e+00> : vector<16xf32>
    %11 = vector.multi_reduction <add>, %10, %cst_8 [1] : vector<16x128xf32> to vector<16xf32>
    %12 = vector.shape_cast %11 : vector<16xf32> to vector<16x1xf32>
    %13 = arith.addf %9, %12 : vector<16x1xf32>
    %c0_9 = arith.constant 0 : index
    %c0_10 = arith.constant 0 : index
    %14 = vector.load %arg6[%c0_9, %c0_10] : memref<16x1xf32, #tpu.memory_space<vmem>>, vector<16x1xf32>
    tpu.vector_store %arg6[%c0_9, %c0_10], %13 {strides = array<i32>} : memref<16x1xf32, #tpu.memory_space<vmem>>, vector<16x1xf32>,
    %c0_i32_11 = arith.constant 0 : i32
    %15 = arith.cmpi eq, %arg1, %c0_i32_11 : i32
    %16 = arith.extui %15 : i1 to i32
    %c0_i32_12 = arith.constant 0 : i32
    %17 = arith.cmpi ne, %16, %c0_i32_12 : i32
    scf.if %17 {
      %c0_13 = arith.constant 0 : index
      %c0_14 = arith.constant 0 : index
      %18 = vector.load %arg5[%c0_13, %c0_14] : memref<16x1xf32, #tpu.memory_space<vmem>>, vector<16x1xf32>
      %cst_15 = arith.constant 7.812500e-03 : f32
      %19 = vector.broadcast %cst_15 : f32 to vector<16x1xf32>
      %20 = arith.mulf %18, %19 : vector<16x1xf32>
      %c0_16 = arith.constant 0 : index
      %c0_17 = arith.constant 0 : index
      %21 = vector.load %arg6[%c0_16, %c0_17] : memref<16x1xf32, #tpu.memory_space<vmem>>, vector<16x1xf32>
      %cst_18 = arith.constant 7.812500e-03 : f32
      %22 = vector.broadcast %cst_18 : f32 to vector<16x1xf32>
      %23 = arith.mulf %21, %22 : vector<16x1xf32>
      %24 = arith.mulf %20, %20 : vector<16x1xf32>
      %25 = arith.subf %23, %24 : vector<16x1xf32>
      %cst_19 = arith.constant 0.000000e+00 : f32
      %26 = vector.broadcast %cst_19 : f32 to vector<16x1xf32>
      %27 = arith.maximumf %25, %26 : vector<16x1xf32>
      %cst_20 = arith.constant 9.99999974E-6 : f32
      %28 = vector.broadcast %cst_20 : f32 to vector<16x1xf32>
      %29 = arith.addf %27, %28 : vector<16x1xf32>
      %30 = math.sqrt %29 : vector<16x1xf32>
      %c0_21 = arith.constant 0 : index
      %c0_22 = arith.constant 0 : index
      %31 = vector.load %arg3[%c0_21, %c0_22] : memref<16x1xf32, #tpu.memory_space<vmem>>, vector<16x1xf32>
      tpu.vector_store %arg3[%c0_21, %c0_22], %20 {strides = array<i32>} : memref<16x1xf32, #tpu.memory_space<vmem>>, vector<16x1xf32>,
      %c0_23 = arith.constant 0 : index
      %c0_24 = arith.constant 0 : index
      %32 = vector.load %arg4[%c0_23, %c0_24] : memref<16x1xf32, #tpu.memory_space<vmem>>, vector<16x1xf32>
      tpu.vector_store %arg4[%c0_23, %c0_24], %30 {strides = array<i32>} : memref<16x1xf32, #tpu.memory_space<vmem>>, vector<16x1xf32>,
    } else {
    }
    return
  }
  func.func @transform_0(%arg0: i32, %arg1: i32) -> (i32, i32) {
    %c0_i32 = arith.constant 0 : i32
    return %arg0, %arg1 : i32, i32
  }
  func.func @transform_1(%arg0: i32, %arg1: i32) -> (i32, i32) {
    %c0_i32 = arith.constant 0 : i32
    %c0_i32_0 = arith.constant 0 : i32
    return %arg0, %c0_i32 : i32, i32
  }
  func.func @transform_2(%arg0: i32, %arg1: i32) -> (i32, i32) {
    %c0_i32 = arith.constant 0 : i32
    %c0_i32_0 = arith.constant 0 : i32
    return %arg0, %c0_i32 : i32, i32
  }
}

</mosaic_0001>

<llo_original>
// kernel: tpu_custom_call.1
$region0: #{tpu_custom_call.1}
  #allocation0 [shape = 'u32[]', space=smem, size = 0x4, offset = 0x4, fixed_abs, tag = 'smem constant byte address 0x4 - core index']
  #allocation1 [shape = 'u32[144,128]{1,0:T(1,128)}', space=vmem, size = 0x12000, scoped, tag = 'internal scratch']
  #allocation2 [shape = 'f32[16,1]{1,0:T(8,128)}', space=vmem, size = 0x2000, scoped, tag = 'scratch operand']
  #allocation3 [shape = 'f32[16,1]{1,0:T(8,128)}', space=vmem, size = 0x2000, scoped, tag = 'scratch operand']
  %s0 = inlined_call_operand.hbm [shape: f32[16,128], index: 0, kind: input, shape index: {}]
  %s1 = inlined_call_operand.vmem [shape: f32[16,1], index: 1, kind: output, shape index: {0}]
  %s2 = inlined_call_operand.vmem [shape: f32[16,1], index: 2, kind: output, shape index: {1}]
  %3 = xla_tuple %s1, %s2
  %s4 = sld [smem:[#allocation0]]
  $region34: #{tpu_custom_call.1} parent=0
    _
  %s6 = ssub.s32 1, %s4
  %s7 = scalar_select 0, %s6, %s4
  $region1: #{tpu_custom_call.1} parent=0
    #allocation4 [shape = 'u8[8192]{0}', space=vmem, size = 0x2000, scoped, tag = 'input window, operand 0, single buffered']
    #allocation5 [shape = 's32[1]{0}', space=sflag, size = 0x4, scoped, tag = 'scoped memory for tpu_custom_call.1']
    %8 = vsyncpa [#allocation5], 0
    // Predicated region
    $region2: #{tpu_custom_call.1} parent=1 // pred_check
      _
    $region3: #{tpu_custom_call.1} parent=1 // pred_check_branch
      %10 = sbr.rel (0) target = $region5
    $region4: #{tpu_custom_call.1} parent=1 // pred_region
      %s12 = ssub.s32 256, 256
      %13 = vsyncadd [#allocation5], %s12
      %s14 = sshll.u32 [#allocation4], 4
      %s15 = int_to_ptr.vmem [resolvable:$true] %s14
      %20 = dma.hbm_to_vmem [thread:$0]  %s0, 256, %s15, [#allocation5], 128, 128, 8
    $region5: #{tpu_custom_call.1} parent=1 // pred_fallthru
      _
    // Predicated region
    $region6: #{tpu_custom_call.1} parent=1 // pred_check
      _
    $region7: #{tpu_custom_call.1} parent=1 // pred_check_branch
      %22 = sbr.rel (0) target = $region9
    $region8: #{tpu_custom_call.1} parent=1 // pred_region
      %23 = dma.done [#allocation5], 256
    $region9: #{tpu_custom_call.1} parent=1 // pred_fallthru
      _
    %p24 = scmp.eq.s32.totalorder 0, 0
    // Predicated region
    $region10: #{tpu_custom_call.1} parent=1 // pred_check
      %p25 = pneg %p24
    $region11: #{tpu_custom_call.1} parent=1 // pred_check_branch
      %27 = sbr.rel (%p25) target = $region13
    $region12: #{tpu_custom_call.1} parent=1 // pred_region
      %vm28 = vcmask 7168
      %29 = vst.msk [vmem:[#allocation2] sm:$0xff] %vm28, 0.0
      %30 = vst.msk [vmem:[#allocation2 + $0x8] sm:$0xff] %vm28, 0.0
      %31 = vst.msk [vmem:[#allocation3] sm:$0xff] %vm28, 0.0
      %32 = vst.msk [vmem:[#allocation3 + $0x8] sm:$0xff] %vm28, 0.0
    $region13: #{tpu_custom_call.1} parent=1 // pred_fallthru
      _
    %v33 = vld [vmem:[#allocation4] sm:$0xff]
    %v34 = vld [vmem:[#allocation4 + $0x8] sm:$0xff]
    %v35 = vld [vmem:[#allocation2] sm:$0xff]
    %v36 = vld [vmem:[#allocation2 + $0x8] sm:$0xff]
    %37 = vadd.xlane.f32.xlu0 %v33
    %v38 = vpop.xlane.xlu0 %37
    %39 = vadd.xlane.f32.xlu0 %v34
    %v40 = vpop.xlane.xlu0 %39
    %v41 = vadd.f32 %v35, %v38
    %v42 = vadd.f32 %v36, %v40
    %vm43 = vcmask 7168
    %44 = vst.msk [vmem:[#allocation2] sm:$0xff] %vm43, %v41
    %45 = vst.msk [vmem:[#allocation2 + $0x8] sm:$0xff] %vm43, %v42
    %v46 = vld [vmem:[#allocation3] sm:$0xff]
    %v47 = vld [vmem:[#allocation3 + $0x8] sm:$0xff]
    %v48 = vmul.f32 %v33, %v33
    %v49 = vmul.f32 %v34, %v34
    %50 = vadd.xlane.f32.xlu0 %v48
    %v51 = vpop.xlane.xlu0 %50
    %52 = vadd.xlane.f32.xlu0 %v49
    %v53 = vpop.xlane.xlu0 %52
    %v54 = vadd.f32 %v46, %v51
    %v55 = vadd.f32 %v47, %v53
    %56 = vst.msk [vmem:[#allocation3] sm:$0xff] %vm43, %v54
    %57 = vst.msk [vmem:[#allocation3 + $0x8] sm:$0xff] %vm43, %v55
    // Predicated region
    $region14: #{tpu_custom_call.1} parent=1 // pred_check
      %p58 = pneg %p24
    $region15: #{tpu_custom_call.1} parent=1 // pred_check_branch
      %60 = sbr.rel (%p58) target = $region17
    $region16: #{tpu_custom_call.1} parent=1 // pred_region
      %v61 = vld [vmem:[#allocation2] sm:$0xff]
      %v62 = vld [vmem:[#allocation2 + $0x8] sm:$0xff]
      %v63 = vmul.f32 %v61, 0.0078125
      %v64 = vmul.f32 %v62, 0.0078125
      %v65 = vld [vmem:[#allocation3] sm:$0xff]
      %v66 = vld [vmem:[#allocation3 + $0x8] sm:$0xff]
      %v67 = vmul.f32 %v65, 0.0078125
      %v68 = vmul.f32 %v66, 0.0078125
      %v69 = vmul.f32 %v63, %v63
      %v70 = vmul.f32 %v64, %v64
      %v71 = vsub.f32 %v67, %v69
      %v72 = vsub.f32 %v68, %v70
      %v73 = vmax.f32 %v71, 0.0
      %v74 = vmax.f32 %v72, 0.0
      %v75 = vadd.f32 %v73, 1e-05
      %v76 = vadd.f32 %v74, 1e-05
      %v77 = vrsqrt.pop %v75
      %v78 = vmul.f32 %v75, %v77
      %vm79 = vcmp.eq.f32.partialorder %v75, inf
      %v80 = vsel %vm79, %v75, %v78
      %vm81 = vcmp.eq.f32.partialorder %v75, 0.0
      %v82 = vand.u32 %v75, 2147483648
      %v83 = vsel %vm81, %v82, %v80
      %v84 = vrsqrt.pop %v76
      %v85 = vmul.f32 %v76, %v84
      %vm86 = vcmp.eq.f32.partialorder %v76, inf
      %v87 = vsel %vm86, %v76, %v85
      %vm88 = vcmp.eq.f32.partialorder %v76, 0.0
      %v89 = vand.u32 %v76, 2147483648
      %v90 = vsel %vm88, %v89, %v87
      %91 = vst.msk [vmem:[%s1] sm:$0xff] %vm43, %v63
      %92 = vst.msk [vmem:[%s1 + $0x8] sm:$0xff] %vm43, %v64
      %93 = vst.msk [vmem:[%s2] sm:$0xff] %vm43, %v83
      %94 = vst.msk [vmem:[%s2 + $0x8] sm:$0xff] %vm43, %v90
    $region17: #{tpu_custom_call.1} parent=1 // pred_fallthru
      _
    // Predicated region
    $region18: #{tpu_custom_call.1} parent=1 // pred_check
      _
    $region19: #{tpu_custom_call.1} parent=1 // pred_check_branch
      %96 = sbr.rel (0) target = $region21
    $region20: #{tpu_custom_call.1} parent=1 // pred_region
      _
    $region21: #{tpu_custom_call.1} parent=1 // pred_fallthru
      _
    // Predicated region
    $region22: #{tpu_custom_call.1} parent=1 // pred_check
      _
    $region23: #{tpu_custom_call.1} parent=1 // pred_check_branch
      %98 = sbr.rel (0) target = $region25
    $region24: #{tpu_custom_call.1} parent=1 // pred_region
      _
    $region25: #{tpu_custom_call.1} parent=1 // pred_fallthru
      _
    // Predicated region
    $region26: #{tpu_custom_call.1} parent=1 // pred_check
      _
    $region27: #{tpu_custom_call.1} parent=1 // pred_check_branch
      %100 = sbr.rel (0) target = $region29
    $region28: #{tpu_custom_call.1} parent=1 // pred_region
      _
    $region29: #{tpu_custom_call.1} parent=1 // pred_fallthru
      _
    // Predicated region
    $region30: #{tpu_custom_call.1} parent=1 // pred_check
      _
    $region31: #{tpu_custom_call.1} parent=1 // pred_check_branch
      %102 = sbr.rel (0) target = $region33
    $region32: #{tpu_custom_call.1} parent=1 // pred_region
      _
    $region33: #{tpu_custom_call.1} parent=1 // pred_fallthru
      _
    %103 = vsyncpa [#allocation5], 1

</llo_original>
